<compile_context>
chip_gen: v6e
topology: v6e:2x2x1
jax: 0.10.0
libtpu: 0.0.40
codegen_flags: <defaults>
</compile_context>

<pallas_src>
import functools
import math

import jax
import jax.numpy as jnp
from jax.experimental import pallas as pl
from jax.experimental.pallas import tpu as pltpu


def _round_up(x, m):
    return ((x + m - 1) // m) * m


# ---------------------------------------------------------------------------
# Fused kernel: (Linear -> ReLU) * (L-1) -> Linear, all in one body.
# ---------------------------------------------------------------------------
def _fused_mlp_kernel(x_ref, *refs, num_layers: int):
    """refs = (w1, b1, w2, b2, ..., wL, bL, o_ref).

    x arrives in its original dtype (f32); the bf16 cast happens here on the
    VPU, so the wrapper never materializes a padded/cast copy in HBM.
    Matmuls accumulate in f32 (MXU), bias add + ReLU stay f32 (v5e-safe VPU),
    intermediate activations are cast back to bf16 and never leave the kernel.
    """
    o_ref = refs[-1]
    h = x_ref[...].astype(jnp.bfloat16)          # [tm, Din] bf16
    for i in range(num_layers):
        w = refs[2 * i][...]                     # bf16 [K, Nout_p]
        b = refs[2 * i + 1][...]                 # f32  [1, Nout_p]
        y = jnp.dot(h, w, preferred_element_type=jnp.float32) + b
        if i < num_layers - 1:
            h = jnp.maximum(y, 0.0).astype(jnp.bfloat16)
        else:
            h = y
    o_ref[...] = h.astype(o_ref.dtype)


# ---------------------------------------------------------------------------
# Batch tiling policy (single source of truth).
# ---------------------------------------------------------------------------
def _batch_tiling(B, max_tm=512):
    """Return (tm, Bp): tm multiple of 16 (packed bf16 sublanes), minimal batch
    padding, >=2 grid steps once the batch is big enough (v7x: 2 TensorCores),
    tiles up to `max_tm` rows for big batches (v5e/v6e HBM roofline)."""
    Bp16 = _round_up(max(B, 1), 16)
    if Bp16 < 32:
        return Bp16, Bp16                        # too small to split
    grid = max(2, pl.cdiv(Bp16, max_tm))         # >=2 steps for v7x megacore
    tm = _round_up(pl.cdiv(Bp16, grid), 16)
    return tm, grid * tm


# ---------------------------------------------------------------------------
# pallas_call wrapper.
# ---------------------------------------------------------------------------
def fused_mlp_pallas(x_p, padded_params, tm, *, out_dtype=jnp.float32,
                     vmem_limit_bytes=None):
    """x_p: [Bp, Din] (any float dtype), Bp % tm == 0, Din untouched/unpadded.
    padded_params: list of (W [K, Nout_p] bf16, b [1, Nout_p] f32).
    Returns [Bp, DoutL_p] out_dtype (lane-dense padded logits)."""
    Bp, Din = x_p.shape
    Dout_p = padded_params[-1][0].shape[1]
    num_layers = len(padded_params)
    assert Bp % tm == 0
    grid = (Bp // tm,)

    in_specs = [pl.BlockSpec((tm, Din), lambda i: (i, 0))]
    flat_args = []
    for (w, b) in padded_params:
        # Constant (0, 0) index_map -> Pallas does not re-DMA these per step.
        in_specs.append(pl.BlockSpec(w.shape, lambda i: (0, 0)))
        in_specs.append(pl.BlockSpec(b.shape, lambda i: (0, 0)))
        flat_args.extend([w, b])
    out_specs = pl.BlockSpec((tm, Dout_p), lambda i: (i, 0))

    kernel = functools.partial(_fused_mlp_kernel, num_layers=num_layers)
    return pl.pallas_call(
        kernel,
        out_shape=jax.ShapeDtypeStruct((Bp, Dout_p), out_dtype),
        grid=grid,
        in_specs=in_specs,
        out_specs=out_specs,
        compiler_params=pltpu.CompilerParams(
            dimension_semantics=("parallel",),
            vmem_limit_bytes=vmem_limit_bytes,
        ),
    )(x_p, *flat_args)


# ---------------------------------------------------------------------------
# Parameter construction (mirrors torch.nn.Linear defaults) + padding.
# ---------------------------------------------------------------------------
def _layer_dims(num_classes, feature_dim, size):
    if size == "s":
        return [feature_dim, num_classes]
    if size == "m":
        return [feature_dim, 100, num_classes]
    if size == "l":
        return [feature_dim, 300, 100, num_classes]
    raise ValueError("Size of LinearNN not correctly specified")


def _init_linear_params(key, fan_in, fan_out):
    """torch.nn.Linear default init: U(-1/sqrt(fan_in), 1/sqrt(fan_in)).
    Weight returned already transposed to [in, out] for y = x @ W + b."""
    kw, kb = jax.random.split(key)
    bound = 1.0 / math.sqrt(fan_in)
    w = jax.random.uniform(kw, (fan_in, fan_out), jnp.float32, -bound, bound)
    b = jax.random.uniform(kb, (1, fan_out), jnp.float32, -bound, bound)
    return w, b


def make_linear_nn_params(key, num_classes, feature_dim, size="s"):
    """Build (padded bf16 kernel params, raw f32 params, layer dims).

    Output dims are padded to 128 (lane-dense).  Layer-0 K stays UNPADDED so x
    needs no feature padding; deeper layers use the padded hidden width as K.
    Padded rows/columns/bias entries are exactly 0, so padded lanes stay 0
    through bias-add + ReLU and contribute nothing downstream.
    """
    dims = _layer_dims(num_classes, feature_dim, size)
    raw_params, padded_params = [], []
    for i in range(len(dims) - 1):
        key, sub = jax.random.split(key)
        fan_in, fan_out = dims[i], dims[i + 1]
        w, b = _init_linear_params(sub, fan_in, fan_out)
        raw_params.append((w, b))
        k_dim = fan_in if i == 0 else _round_up(fan_in, 128)
        n_dim = _round_up(fan_out, 128)
        w_p = jnp.zeros((k_dim, n_dim), jnp.bfloat16)
        w_p = w_p.at[:fan_in, :fan_out].set(w.astype(jnp.bfloat16))
        b_p = jnp.zeros((1, n_dim), jnp.float32)
        b_p = b_p.at[:, :fan_out].set(b)
        padded_params.append((w_p, b_p))
    return padded_params, raw_params, dims


# ---------------------------------------------------------------------------
# Forward pass wrapper.
# ---------------------------------------------------------------------------
def linear_nn_forward(x, padded_params, num_classes, *, max_tm=512):
    """x: [B, feature_dim] float -> logits [B, num_classes] f32."""
    B, Din = x.shape
    assert padded_params[0][0].shape[0] == Din, "feature_dim mismatch"
    Dout_p = padded_params[-1][0].shape[1]

    tm, Bp = _batch_tiling(B, max_tm)
    if Bp != B:                                   # batch-only pad, no cast,
        x = jnp.pad(x, ((0, Bp - B), (0, 0)))     # feature axis untouched

    # Raise scoped VMEM only if the working set outgrows the small default
    # (v5e default is 16 MiB); cap at v7x's 64 MiB physical budget.
    itemsize = jnp.dtype(x.dtype).itemsize
    est = 2 * tm * Din * itemsize + 2 * tm * Dout_p * 4
    for (w, b) in padded_params:
        est += 2 * (w.size * 2 + b.size * 4) + 2 * tm * w.shape[1] * 4
    vmem_limit = min(2 * est, 64 << 20) if est > (16 << 20) else None

    out_p = fused_mlp_pallas(x, padded_params, tm, vmem_limit_bytes=vmem_limit)
    return out_p[:B, :num_classes]


# ---------------------------------------------------------------------------
# Self-test
# ---------------------------------------------------------------------------
def _reference_bf16(x, padded_params, num_classes):
    """Plain-JAX reference reproducing the exact kernel numerics."""
    h = x.astype(jnp.bfloat16)
    n = len(padded_params)
    for i, (w, b) in enumerate(padded_params):
        y = jnp.dot(h, w, preferred_element_type=jnp.float32) + b
        h = jnp.maximum(y, 0.0).astype(jnp.bfloat16) if i < n - 1 else y
    return h[:, :num_classes]


def _reference_f32(x, raw_params):
    """Full-precision reference matching the PyTorch LinearNN forward."""
    h = x
    n = len(raw_params)
    for i, (w, b) in enumerate(raw_params):
        h = h @ w + b
        if i < n - 1:
            h = jnp.maximum(h, 0.0)
    return h


if __name__ == "__main__":
    # Small shapes, deliberately NOT multiples of 8/128/16 to exercise the
    # padding-free feature path and the batch-tiling policy.
    batch = 6
    feature_dim = 120
    num_classes = 10

    key = jax.random.PRNGKey(0)
    kx, kp = jax.random.split(key)
    x = jax.random.normal(kx, (batch, feature_dim), jnp.float32)

    ok = True
    for size in ("s", "m", "l"):
        padded_params, raw_params, _ = make_linear_nn_params(
            kp, num_classes, feature_dim, size=size)
        out = jax.block_until_ready(
            linear_nn_forward(x, padded_params, num_classes))

        ok = ok and out.shape == (batch, num_classes)
        # Exact-numerics check (bf16 weights/activations, f32 accumulate).
        ref_k = _reference_bf16(x, padded_params, num_classes)
        ok = ok and bool(jnp.allclose(out, ref_k, atol=1e-3, rtol=1e-3))
        # Fidelity check against the true f32 PyTorch-style forward.
        ref_f = _reference_f32(x, raw_params)
        ok = ok and bool(jnp.allclose(out, ref_f, atol=5e-2, rtol=5e-2))

    assert ok
    print("KERNEL_OK")
</pallas_src>

<mosaic_0001>
module attributes {stable_mosaic.version = 11 : i64} {
  func.func @_fused_mlp_kernel(%arg0: i32, %arg1: memref<16x120xf32, #tpu.memory_space<vmem>>, %arg2: memref<120x128xbf16, #tpu.memory_space<vmem>>, %arg3: memref<1x128xf32, #tpu.memory_space<vmem>>, %arg4: memref<16x128xf32, #tpu.memory_space<vmem>>) attributes {dimension_semantics = [#tpu.dimension_semantics<parallel>], iteration_bounds = array<i64: 1>, scalar_prefetch = 0 : i64, scratch_operands = 0 : i64, tpu.core_type = #tpu.core_type<tc>, window_params = [{transform_indices = @transform_0, window_bounds = array<i64: 16, 120>}, {pipeline_mode = #tpu.pipeline_mode<synchronous>, transform_indices = @transform_1, window_bounds = array<i64: 120, 128>}, {pipeline_mode = #tpu.pipeline_mode<synchronous>, transform_indices = @transform_2, window_bounds = array<i64: 1, 128>}, {transform_indices = @transform_3, window_bounds = array<i64: 16, 128>}]} {
    %c0 = arith.constant 0 : index
    %c0_0 = arith.constant 0 : index
    %0 = vector.load %arg1[%c0, %c0_0] : memref<16x120xf32, #tpu.memory_space<vmem>>, vector<16x120xf32>
    %1 = arith.truncf %0 : vector<16x120xf32> to vector<16x120xbf16>
    %c0_1 = arith.constant 0 : index
    %c0_2 = arith.constant 0 : index
    %2 = vector.load %arg2[%c0_1, %c0_2] : memref<120x128xbf16, #tpu.memory_space<vmem>>, vector<120x128xbf16>
    %c0_3 = arith.constant 0 : index
    %c0_4 = arith.constant 0 : index
    %3 = vector.load %arg3[%c0_3, %c0_4] : memref<1x128xf32, #tpu.memory_space<vmem>>, vector<1x128xf32>
    %cst = arith.constant dense<0.000000e+00> : vector<16x128xf32>
    %4 = tpu.matmul %1, %2, %cst {dimension_numbers = #tpu.dot_dimension_numbers<[1], [0], [0], [1], [0, 0, 1, 1], [], []>} : vector<16x120xbf16>, vector<120x128xbf16>, vector<16x128xf32> -> vector<16x128xf32>
    %5 = vector.broadcast %3 : vector<1x128xf32> to vector<16x128xf32>
    %6 = arith.addf %4, %5 : vector<16x128xf32>
    %c0_5 = arith.constant 0 : index
    %c0_6 = arith.constant 0 : index
    %7 = vector.load %arg4[%c0_5, %c0_6] : memref<16x128xf32, #tpu.memory_space<vmem>>, vector<16x128xf32>
    tpu.vector_store %arg4[%c0_5, %c0_6], %6 {strides = array<i32>} : memref<16x128xf32, #tpu.memory_space<vmem>>, vector<16x128xf32>,
    return
  }
  func.func @transform_0(%arg0: i32) -> (i32, i32) {
    %c0_i32 = arith.constant 0 : i32
    %c0_i32_0 = arith.constant 0 : i32
    return %arg0, %c0_i32 : i32, i32
  }
  func.func @transform_1(%arg0: i32) -> (i32, i32) {
    %c0_i32 = arith.constant 0 : i32
    %c0_i32_0 = arith.constant 0 : i32
    %c0_i32_1 = arith.constant 0 : i32
    return %c0_i32, %c0_i32_0 : i32, i32
  }
  func.func @transform_2(%arg0: i32) -> (i32, i32) {
    %c0_i32 = arith.constant 0 : i32
    %c0_i32_0 = arith.constant 0 : i32
    %c0_i32_1 = arith.constant 0 : i32
    return %c0_i32, %c0_i32_0 : i32, i32
  }
  func.func @transform_3(%arg0: i32) -> (i32, i32) {
    %c0_i32 = arith.constant 0 : i32
    %c0_i32_0 = arith.constant 0 : i32
    return %arg0, %c0_i32 : i32, i32
  }
}

</mosaic_0001>

<llo_original>
// kernel: tpu_custom_call.1
$region0: #{tpu_custom_call.1}
  #allocation0 [shape = 'u32[]', space=smem, size = 0x4, offset = 0x4, fixed_abs, tag = 'smem constant byte address 0x4 - core index']
  #allocation1 [shape = 'u32[144,128]{1,0:T(1,128)}', space=vmem, size = 0x12000, scoped, tag = 'internal scratch']
  %s0 = inlined_call_operand.hbm [shape: f32[16,120], index: 0, kind: input, shape index: {}]
  %s1 = inlined_call_operand.hbm [shape: bf16[120,128], index: 1, kind: input, shape index: {}]
  %s2 = inlined_call_operand.vmem [shape: f32[1,128], index: 2, kind: input, shape index: {}]
  %s3 = inlined_call_operand.hbm [shape: f32[16,128], index: 3, kind: output, shape index: {}]
  %s4 = sld [smem:[#allocation0]]
  $region30: #{tpu_custom_call.1} parent=0
    _
  %s6 = ssub.s32 1, %s4
  %s7 = scalar_select 0, %s6, %s4
  $region1: #{tpu_custom_call.1} parent=0
    #allocation2 [shape = 'u8[8192]{0}', space=vmem, size = 0x2000, scoped, tag = 'input window, operand 0, single buffered']
    #allocation3 [shape = 's32[1]{0}', space=sflag, size = 0x4, scoped, tag = 'scoped memory for tpu_custom_call.1']
    #allocation4 [shape = 's32[1]{0}', space=sflag, size = 0x4, scoped, tag = 'scoped memory for tpu_custom_call.1']
    #allocation5 [shape = 'u8[30720]{0}', space=vmem, size = 0x7800, scoped, tag = 'input window, operand 1, single buffered']
    #allocation6 [shape = 's32[1]{0}', space=sflag, size = 0x4, scoped, tag = 'scoped memory for tpu_custom_call.1']
    #allocation7 [shape = 'u8[8192]{0}', space=vmem, size = 0x2000, scoped, tag = 'output window, operand 0, single buffered']
    %8 = vsyncpa [#allocation3], 0
    %9 = vsyncpa [#allocation6], 0
    %10 = vsyncpa [#allocation4], 0
    // Predicated region
    $region2: #{tpu_custom_call.1} parent=1 // pred_check
      _
    $region3: #{tpu_custom_call.1} parent=1 // pred_check_branch
      %12 = sbr.rel (0) target = $region5
    $region4: #{tpu_custom_call.1} parent=1 // pred_region
      %s14 = ssub.s32 256, 256
      %15 = vsyncadd [#allocation3], %s14
      %s16 = sshll.u32 [#allocation2], 4
      %s17 = int_to_ptr.vmem [resolvable:$true] %s16
      %22 = dma.hbm_to_vmem [thread:$0]  %s0, 256, %s17, [#allocation3], 128, 128, 8
    $region5: #{tpu_custom_call.1} parent=1 // pred_fallthru
      _
    // Predicated region
    $region6: #{tpu_custom_call.1} parent=1 // pred_check
      _
    $region7: #{tpu_custom_call.1} parent=1 // pred_check_branch
      %24 = sbr.rel (0) target = $region9
    $region8: #{tpu_custom_call.1} parent=1 // pred_region
      %s26 = ssub.s32 960, 960
      %27 = vsyncadd [#allocation6], %s26
      %s28 = sshll.u32 [#allocation5], 4
      %s29 = int_to_ptr.vmem [resolvable:$true] %s28
      %34 = dma.hbm_to_vmem [thread:$0]  %s1, 960, %s29, [#allocation6], 64, 64, 4
    $region9: #{tpu_custom_call.1} parent=1 // pred_fallthru
      _
    // Predicated region
    $region10: #{tpu_custom_call.1} parent=1 // pred_check
      _
    $region11: #{tpu_custom_call.1} parent=1 // pred_check_branch
      %36 = sbr.rel (0) target = $region13
    $region12: #{tpu_custom_call.1} parent=1 // pred_region
      _
    $region13: #{tpu_custom_call.1} parent=1 // pred_fallthru
      _
    // Predicated region
    $region14: #{tpu_custom_call.1} parent=1 // pred_check
      _
    $region15: #{tpu_custom_call.1} parent=1 // pred_check_branch
      %38 = sbr.rel (0) target = $region17
    $region16: #{tpu_custom_call.1} parent=1 // pred_region
      %39 = dma.done [#allocation3], 256
    $region17: #{tpu_custom_call.1} parent=1 // pred_fallthru
      _
    // Predicated region
    $region18: #{tpu_custom_call.1} parent=1 // pred_check
      _
    $region19: #{tpu_custom_call.1} parent=1 // pred_check_branch
      %41 = sbr.rel (0) target = $region21
    $region20: #{tpu_custom_call.1} parent=1 // pred_region
      %42 = dma.done [#allocation6], 960
    $region21: #{tpu_custom_call.1} parent=1 // pred_fallthru
      _
    %v44 = vld [vmem:[#allocation2] sm:$0xff]
    %v45 = vld [vmem:[#allocation2 + $0x8] sm:$0xff]
    %v46 = vpack.c.bf16 %v45, %v44
    %v47 = vld [vmem:[#allocation5] sm:$0xf]
    %v48 = vld [vmem:[#allocation5 + $0x4] sm:$0xf]
    %v49 = vld [vmem:[#allocation5 + $0x8] sm:$0xf]
    %v50 = vld [vmem:[#allocation5 + $0xc] sm:$0xf]
    %v51 = vld [vmem:[#allocation5 + $0x10] sm:$0xf]
    %v52 = vld [vmem:[#allocation5 + $0x14] sm:$0xf]
    %v53 = vld [vmem:[#allocation5 + $0x18] sm:$0xf]
    %v54 = vld [vmem:[#allocation5 + $0x1c] sm:$0xf]
    %v55 = vld [vmem:[#allocation5 + $0x20] sm:$0xf]
    %v56 = vld [vmem:[#allocation5 + $0x24] sm:$0xf]
    %v57 = vld [vmem:[#allocation5 + $0x28] sm:$0xf]
    %v58 = vld [vmem:[#allocation5 + $0x2c] sm:$0xf]
    %v59 = vld [vmem:[#allocation5 + $0x30] sm:$0xf]
    %v60 = vld [vmem:[#allocation5 + $0x34] sm:$0xf]
    %v61 = vld [vmem:[#allocation5 + $0x38] sm:$0xf]
    %v62 = vld [vmem:[%s2] sm:$0x1]
    %v64 = vlaneseq
    %v65 = vshrl.u32 %v64, 7
    %v66 = vsub.s32 0, %v65
    %v67 = vrot.slane %v62, %v66
    %v84 = vunpack.c.l.b16 %v47
    %v85 = vunpack.c.l.b16 %v48
    %v86 = vunpack.c.l.b16 %v49
    %v87 = vunpack.c.l.b16 %v50
    %v88 = vunpack.c.l.b16 %v51
    %v89 = vunpack.c.l.b16 %v52
    %v90 = vunpack.c.l.b16 %v53
    %v91 = vunpack.c.l.b16 %v54
    %v92 = vunpack.c.l.b16 %v55
    %v93 = vunpack.c.l.b16 %v56
    %v94 = vunpack.c.l.b16 %v57
    %v95 = vunpack.c.l.b16 %v58
    %v96 = vunpack.c.l.b16 %v59
    %v97 = vunpack.c.l.b16 %v60
    %v98 = vunpack.c.l.b16 %v61
    %v99 = vpack.c.b16 %v85, %v84
    %v100 = vpack.c.b16 %v87, %v86
    %v101 = vpack.c.b16 %v89, %v88
    %v102 = vpack.c.b16 %v91, %v90
    %v103 = vpack.c.b16 %v93, %v92
    %v104 = vpack.c.b16 %v95, %v94
    %v105 = vpack.c.b16 %v97, %v96
    %v106 = vpack.c.b16 %v98, %v98
    %vm114 = vcmask 982016
    %v116 = vsel %vm114, %v46, 0
    %vm118 = vcmask 1043456
    %v120 = vsel %vm118, %v106, 0
    %122 = vmatprep.subr.bf16.mxu0 0
    %123 = vmatpush1.bf16.msra.mxu0 %v120
    %124 = vmatprep.subr.bf16.mxu0 0
    %125 = vmatpush1.bf16.msra.mxu0 %v105
    %126 = vmatprep.subr.bf16.mxu0 0
    %127 = vmatpush1.bf16.msra.mxu0 %v104
    %128 = vmatprep.subr.bf16.mxu0 0
    %129 = vmatpush1.bf16.msra.mxu0 %v103
    %130 = vmatprep.subr.bf16.mxu0 0
    %131 = vmatpush1.bf16.msra.mxu0 %v102
    %132 = vmatprep.subr.bf16.mxu0 0
    %133 = vmatpush1.bf16.msra.mxu0 %v101
    %134 = vmatprep.subr.bf16.mxu0 0
    %135 = vmatpush1.bf16.msra.mxu0 %v100
    %136 = vmatprep.subr.bf16.mxu0 0
    %137 = vmatpush1.bf16.msra.mxu0 %v99
    %138 = vmatprep.subr.bf16.mxu0 0
    %139 = vmatpush2.bf16.msra.mxu0 0
    %140 = vmatprep.subr.bf16.mxu0 0
    %141 = vmatpush2.bf16.msra.mxu0 0
    %142 = vmatprep.subr.bf16.mxu0 0
    %143 = vmatpush2.bf16.msra.mxu0 0
    %144 = vmatprep.subr.bf16.mxu0 0
    %145 = vmatpush2.bf16.msra.mxu0 0
    %146 = vmatprep.subr.bf16.mxu0 0
    %147 = vmatpush2.bf16.msra.mxu0 0
    %148 = vmatprep.subr.bf16.mxu0 0
    %149 = vmatpush2.bf16.msra.mxu0 0
    %150 = vmatprep.subr.bf16.mxu0 0
    %151 = vmatpush2.bf16.msra.mxu0 0
    %152 = vmatprep.subr.bf16.mxu0 0
    %153 = vmatpush2.bf16.msra.mxu0 0
    %154 = vmatprep.mubr.bf16.mxu0 0
    %155 = vmatmul.mubr.bf16.gmra.mxu0 %v116
    %v156 = vpop.f32.mrf.mxu0
    %v157 = vadd.f32 %v67, %v156
    %v158 = vpop.f32.mrf.mxu0
    %v159 = vpop.f32.mrf.mxu0
    %v160 = vadd.f32 %v67, %v159
    %v161 = vpop.f32.mrf.mxu0
    %162 = vdwg.mxu0
    %163 = vst [vmem:[#allocation7] sm:$0xff] %v157
    %164 = vst [vmem:[#allocation7 + $0x8] sm:$0xff] %v160
    // Predicated region
    $region22: #{tpu_custom_call.1} parent=1 // pred_check
      _
    $region23: #{tpu_custom_call.1} parent=1 // pred_check_branch
      %166 = sbr.rel (0) target = $region25
    $region24: #{tpu_custom_call.1} parent=1 // pred_region
      %s168 = ssub.s32 256, 256
      %169 = vsyncadd [#allocation4], %s168
      %s170 = sshll.u32 [#allocation7], 4
      %s171 = int_to_ptr.vmem [resolvable:$true] %s170
      %176 = dma.vmem_to_hbm [thread:$0]  %s171, 256, %s3, [#allocation4], 128, 128, 8
    $region25: #{tpu_custom_call.1} parent=1 // pred_fallthru
      _
    // Predicated region
    $region26: #{tpu_custom_call.1} parent=1 // pred_check
      _
    $region27: #{tpu_custom_call.1} parent=1 // pred_check_branch
      %178 = sbr.rel (0) target = $region29
    $region28: #{tpu_custom_call.1} parent=1 // pred_region
      %179 = dma.done [#allocation4], 256
    $region29: #{tpu_custom_call.1} parent=1 // pred_fallthru
      _
    %180 = vsyncpa [#allocation3], 1
    %181 = vsyncpa [#allocation6], 1
    %182 = vsyncpa [#allocation4], 1

</llo_original>
